<compile_context>
chip_gen: v7x
topology: tpu7x:2x2x1
jax: 0.10.0
libtpu: 0.0.40
codegen_flags: <defaults>
</compile_context>

<pallas_src>
import functools

import jax
import jax.numpy as jnp
from jax.experimental import pallas as pl
from jax.experimental.pallas import tpu as pltpu


def _jaccard_kernel(p_ref, t_ref, out_ref, inter_acc, sum_acc, *, smooth):
    ni = pl.program_id(1)          # batch  (reduction)
    ri = pl.program_id(2)          # H-tile (reduction)

    first_red = jnp.logical_and(ni == 0, ri == 0)
    last_red = jnp.logical_and(ni == pl.num_programs(1) - 1,
                               ri == pl.num_programs(2) - 1)

    # Reset block-shaped accumulators at the start of each channel's reduction.
    @pl.when(first_red)
    def _():
        inter_acc[...] = jnp.zeros_like(inter_acc)
        sum_acc[...] = jnp.zeros_like(sum_acc)

    p = p_ref[...].astype(jnp.float32)
    t = t_ref[...].astype(jnp.float32)

    # Pure elementwise accumulation in the hot loop (no per-step XLU reduce).
    inter_acc[...] += p * t
    sum_acc[...] += p + t          # sum(p) + sum(t) merged into one accumulator

    # Finalize this channel: full reduce + IoU, written to this channel's block.
    @pl.when(last_red)
    def _():
        inter = jnp.sum(inter_acc[...])
        union = jnp.sum(sum_acc[...]) - inter
        iou = inter / (union + jnp.float32(smooth))
        out_ref[...] = jnp.broadcast_to(iou, out_ref.shape).astype(jnp.float32)


def _choose_h_tile(h, w, itemsize, target_bytes):
    """Largest H-tile that (a) divides H, (b) is a multiple of 8 or == H,
    and (c) keeps a (th, W) block under ~target_bytes."""
    if h * w * itemsize <= target_bytes:
        return h
    max_rows = max(8, target_bytes // (w * itemsize))
    start = min(max_rows, h)
    start -= start % 8
    for th in range(start, 7, -8):
        if h % th == 0:
            return th
    return h  # no friendly divisor: fall back to the full plane


def jaccard_index(preds, targets, *, measure_background=False, smooth=1e-07,
                  block_target_bytes=1 << 20):
    """Pallas implementation of JaccardIndex.forward. Returns scalar float32."""
    assert preds.shape == targets.shape, "preds/targets shape mismatch"
    n, c, h, w = preds.shape
    c_off = 0 if measure_background else 1
    c_eff = c - c_off
    if c_eff <= 0:
        raise ValueError("No channels left after dropping the background.")

    itemsize = jnp.dtype(preds.dtype).itemsize
    th = _choose_h_tile(h, w, itemsize, block_target_bytes)
    ht = h // th

    grid = (c_eff, n, ht)

    def in_map(ci, ni, ri):
        # NCHW block index: (batch, channel(+offset), H tile, full W).
        return (ni, ci + c_off, ri, 0)

    in_spec = pl.BlockSpec((pl.Squeezed(), pl.Squeezed(), th, w), in_map)

    # One (1, 1) output block per channel (last two dims == full array dims).
    out_spec = pl.BlockSpec((pl.Squeezed(), 1, 1), lambda ci, ni, ri: (ci, 0, 0))

    kernel = functools.partial(_jaccard_kernel, smooth=float(smooth))

    total_elems = n * c_eff * h * w
    cost = pl.CostEstimate(
        flops=3 * total_elems,            # mul + 2 accumulating adds per pair
        transcendentals=0,
        bytes_accessed=2 * total_elems * itemsize,
    )

    iou_per_channel = pl.pallas_call(
        kernel,
        out_shape=jax.ShapeDtypeStruct((c_eff, 1, 1), jnp.float32),
        grid_spec=pltpu.PrefetchScalarGridSpec(
            num_scalar_prefetch=0,
            grid=grid,
            in_specs=[in_spec, in_spec],
            out_specs=out_spec,
            scratch_shapes=[
                pltpu.VMEM((th, w), jnp.float32),   # sum(p * t) accumulator
                pltpu.VMEM((th, w), jnp.float32),   # sum(p) + sum(t) accumulator
            ],
        ),
        compiler_params=pltpu.CompilerParams(
            # Channels are independent -> parallel (megacore split on v7x);
            # (N, H-tile) carry the accumulators -> arbitrary.
            dimension_semantics=("parallel", "arbitrary", "arbitrary"),
        ),
        cost_estimate=cost,
    )(preds, targets)

    return jnp.mean(iou_per_channel)


def _reference(preds, targets, *, measure_background=False, smooth=1e-07):
    if not measure_background:
        preds = preds[:, 1:]
        targets = targets[:, 1:]
    preds = preds.astype(jnp.float32)
    targets = targets.astype(jnp.float32)
    inter = jnp.sum(targets * preds, axis=(0, 2, 3))
    union = jnp.sum(targets, axis=(0, 2, 3)) + jnp.sum(preds, axis=(0, 2, 3)) - inter
    return jnp.mean(inter / (union + smooth))


if __name__ == "__main__":
    key = jax.random.PRNGKey(0)
    k1, k2 = jax.random.split(key)

    # Small NCHW shapes: batch=2, channels=4 (channel 0 = background), 16x16.
    n, c, h, w = 2, 4, 16, 16
    preds = jax.nn.softmax(jax.random.normal(k1, (n, c, h, w), jnp.float32), axis=1)
    labels = jax.random.randint(k2, (n, h, w), 0, c)
    targets = jax.nn.one_hot(labels, c, dtype=jnp.float32)          # (N,H,W,C)
    targets = jnp.transpose(targets, (0, 3, 1, 2))                  # (N,C,H,W)

    out = jaccard_index(preds, targets, measure_background=False, smooth=1e-07)
    out = jax.block_until_ready(out)

    ref = _reference(preds, targets, measure_background=False, smooth=1e-07)
    assert jnp.allclose(out, ref, rtol=1e-5, atol=1e-6), (out, ref)

    print("KERNEL_OK")
</pallas_src>

<mosaic_0001>
module attributes {stable_mosaic.version = 11 : i64} {
  func.func @_jaccard_kernel(%arg0: i32, %arg1: i32, %arg2: i32, %arg3: memref<1x1x16x16xf32, #tpu.memory_space<vmem>>, %arg4: memref<1x1x16x16xf32, #tpu.memory_space<vmem>>, %arg5: memref<1x1x1xf32, #tpu.memory_space<vmem>>, %arg6: memref<16x16xf32, #tpu.memory_space<vmem>>, %arg7: memref<16x16xf32, #tpu.memory_space<vmem>>) attributes {dimension_semantics = [#tpu.dimension_semantics<parallel>, #tpu.dimension_semantics<arbitrary>, #tpu.dimension_semantics<arbitrary>], iteration_bounds = array<i64: 3, 2, 1>, scalar_prefetch = 0 : i64, scratch_operands = 2 : i64, tpu.core_type = #tpu.core_type<tc>, window_params = [{transform_indices = @transform_0, window_bounds = array<i64: 1, 1, 16, 16>}, {transform_indices = @transform_1, window_bounds = array<i64: 1, 1, 16, 16>}, {transform_indices = @transform_2, window_bounds = array<i64: 1, 1, 1>}]} {
    %c0_i32 = arith.constant 0 : i32
    %0 = arith.cmpi eq, %arg1, %c0_i32 : i32
    %c0_i32_0 = arith.constant 0 : i32
    %1 = arith.cmpi eq, %arg2, %c0_i32_0 : i32
    %2 = arith.andi %0, %1 : i1
    %c1_i32 = arith.constant 1 : i32
    %3 = arith.cmpi eq, %arg1, %c1_i32 : i32
    %c0_i32_1 = arith.constant 0 : i32
    %4 = arith.cmpi eq, %arg2, %c0_i32_1 : i32
    %5 = arith.andi %3, %4 : i1
    %6 = arith.extui %2 : i1 to i32
    %c0_i32_2 = arith.constant 0 : i32
    %7 = arith.cmpi ne, %6, %c0_i32_2 : i32
    scf.if %7 {
      %cst = arith.constant 0.000000e+00 : f32
      %22 = vector.broadcast %cst : f32 to vector<16x16xf32>
      %c0_19 = arith.constant 0 : index
      %c0_20 = arith.constant 0 : index
      %23 = vector.load %arg6[%c0_19, %c0_20] : memref<16x16xf32, #tpu.memory_space<vmem>>, vector<16x16xf32>
      tpu.vector_store %arg6[%c0_19, %c0_20], %22 {strides = array<i32>} : memref<16x16xf32, #tpu.memory_space<vmem>>, vector<16x16xf32>,
      %cst_21 = arith.constant 0.000000e+00 : f32
      %24 = vector.broadcast %cst_21 : f32 to vector<16x16xf32>
      %c0_22 = arith.constant 0 : index
      %c0_23 = arith.constant 0 : index
      %25 = vector.load %arg7[%c0_22, %c0_23] : memref<16x16xf32, #tpu.memory_space<vmem>>, vector<16x16xf32>
      tpu.vector_store %arg7[%c0_22, %c0_23], %24 {strides = array<i32>} : memref<16x16xf32, #tpu.memory_space<vmem>>, vector<16x16xf32>,
    } else {
    }
    %c0 = arith.constant 0 : index
    %c0_3 = arith.constant 0 : index
    %c0_4 = arith.constant 0 : index
    %c0_5 = arith.constant 0 : index
    %8 = vector.load %arg3[%c0, %c0_3, %c0_4, %c0_5] : memref<1x1x16x16xf32, #tpu.memory_space<vmem>>, vector<1x1x16x16xf32>
    %9 = vector.shape_cast %8 : vector<1x1x16x16xf32> to vector<16x16xf32>
    %c0_6 = arith.constant 0 : index
    %c0_7 = arith.constant 0 : index
    %c0_8 = arith.constant 0 : index
    %c0_9 = arith.constant 0 : index
    %10 = vector.load %arg4[%c0_6, %c0_7, %c0_8, %c0_9] : memref<1x1x16x16xf32, #tpu.memory_space<vmem>>, vector<1x1x16x16xf32>
    %11 = vector.shape_cast %10 : vector<1x1x16x16xf32> to vector<16x16xf32>
    %c0_10 = arith.constant 0 : index
    %c0_11 = arith.constant 0 : index
    %12 = vector.load %arg6[%c0_10, %c0_11] : memref<16x16xf32, #tpu.memory_space<vmem>>, vector<16x16xf32>
    %13 = arith.mulf %9, %11 : vector<16x16xf32>
    %14 = arith.addf %12, %13 : vector<16x16xf32>
    %c0_12 = arith.constant 0 : index
    %c0_13 = arith.constant 0 : index
    %15 = vector.load %arg6[%c0_12, %c0_13] : memref<16x16xf32, #tpu.memory_space<vmem>>, vector<16x16xf32>
    tpu.vector_store %arg6[%c0_12, %c0_13], %14 {strides = array<i32>} : memref<16x16xf32, #tpu.memory_space<vmem>>, vector<16x16xf32>,
    %c0_14 = arith.constant 0 : index
    %c0_15 = arith.constant 0 : index
    %16 = vector.load %arg7[%c0_14, %c0_15] : memref<16x16xf32, #tpu.memory_space<vmem>>, vector<16x16xf32>
    %17 = arith.addf %9, %11 : vector<16x16xf32>
    %18 = arith.addf %16, %17 : vector<16x16xf32>
    %c0_16 = arith.constant 0 : index
    %c0_17 = arith.constant 0 : index
    %19 = vector.load %arg7[%c0_16, %c0_17] : memref<16x16xf32, #tpu.memory_space<vmem>>, vector<16x16xf32>
    tpu.vector_store %arg7[%c0_16, %c0_17], %18 {strides = array<i32>} : memref<16x16xf32, #tpu.memory_space<vmem>>, vector<16x16xf32>,
    %20 = arith.extui %5 : i1 to i32
    %c0_i32_18 = arith.constant 0 : i32
    %21 = arith.cmpi ne, %20, %c0_i32_18 : i32
    scf.if %21 {
      %c0_19 = arith.constant 0 : index
      %c0_20 = arith.constant 0 : index
      %22 = vector.load %arg6[%c0_19, %c0_20] : memref<16x16xf32, #tpu.memory_space<vmem>>, vector<16x16xf32>
      %23 = vector.shape_cast %22 : vector<16x16xf32> to vector<1x16x16xf32>
      %cst = arith.constant dense<0.000000e+00> : vector<1xf32>
      %24 = vector.multi_reduction <add>, %23, %cst [1, 2] : vector<1x16x16xf32> to vector<1xf32>
      %25 = vector.shape_cast %24 : vector<1xf32> to vector<1x1x1xf32>
      %26 = vector.extract %25[0, 0, 0] : f32 from vector<1x1x1xf32>
      %c0_21 = arith.constant 0 : index
      %c0_22 = arith.constant 0 : index
      %27 = vector.load %arg7[%c0_21, %c0_22] : memref<16x16xf32, #tpu.memory_space<vmem>>, vector<16x16xf32>
      %28 = vector.shape_cast %27 : vector<16x16xf32> to vector<1x16x16xf32>
      %cst_23 = arith.constant dense<0.000000e+00> : vector<1xf32>
      %29 = vector.multi_reduction <add>, %28, %cst_23 [1, 2] : vector<1x16x16xf32> to vector<1xf32>
      %30 = vector.shape_cast %29 : vector<1xf32> to vector<1x1x1xf32>
      %31 = vector.extract %30[0, 0, 0] : f32 from vector<1x1x1xf32>
      %32 = arith.subf %31, %26 : f32
      %cst_24 = arith.constant 1.000000e-07 : f32
      %33 = arith.addf %32, %cst_24 : f32
      %34 = arith.divf %26, %33 : f32
      %35 = vector.broadcast %34 : f32 to vector<1x1xf32>
      %c0_25 = arith.constant 0 : index
      %c0_26 = arith.constant 0 : index
      %c0_27 = arith.constant 0 : index
      %36 = vector.load %arg5[%c0_25, %c0_26, %c0_27] : memref<1x1x1xf32, #tpu.memory_space<vmem>>, vector<1x1x1xf32>
      %37 = vector.shape_cast %36 : vector<1x1x1xf32> to vector<1x1xf32>
      %38 = vector.shape_cast %35 : vector<1x1xf32> to vector<1x1x1xf32>
      tpu.vector_store %arg5[%c0_25, %c0_26, %c0_27], %38 {strides = array<i32>} : memref<1x1x1xf32, #tpu.memory_space<vmem>>, vector<1x1x1xf32>,
    } else {
    }
    return
  }
  func.func @transform_0(%arg0: i32, %arg1: i32, %arg2: i32) -> (i32, i32, i32, i32) {
    %c1_i32 = arith.constant 1 : i32
    %0 = arith.addi %arg0, %c1_i32 : i32
    %c0_i32 = arith.constant 0 : i32
    %c0_i32_0 = arith.constant 0 : i32
    return %arg1, %0, %arg2, %c0_i32 : i32, i32, i32, i32
  }
  func.func @transform_1(%arg0: i32, %arg1: i32, %arg2: i32) -> (i32, i32, i32, i32) {
    %c1_i32 = arith.constant 1 : i32
    %0 = arith.addi %arg0, %c1_i32 : i32
    %c0_i32 = arith.constant 0 : i32
    %c0_i32_0 = arith.constant 0 : i32
    return %arg1, %0, %arg2, %c0_i32 : i32, i32, i32, i32
  }
  func.func @transform_2(%arg0: i32, %arg1: i32, %arg2: i32) -> (i32, i32, i32) {
    %c0_i32 = arith.constant 0 : i32
    %c0_i32_0 = arith.constant 0 : i32
    %c0_i32_1 = arith.constant 0 : i32
    return %arg0, %c0_i32, %c0_i32_0 : i32, i32, i32
  }
}

</mosaic_0001>

<llo_original>
// kernel: tpu_custom_call.1
$region0: #{tpu_custom_call.1}
  #allocation0 [shape = 'u32[]', space=smem, size = 0x4, offset = 0x4, fixed_abs, tag = 'smem constant byte address 0x4 - core index']
  #allocation1 [shape = 'u32[144,128]{1,0:T(1,128)}', space=vmem, size = 0x12000, scoped, tag = 'internal scratch']
  #allocation2 [shape = 'f32[16,16]{1,0:T(8,128)}', space=vmem, size = 0x2000, scoped, tag = 'scratch operand']
  #allocation3 [shape = 'f32[16,16]{1,0:T(8,128)}', space=vmem, size = 0x2000, scoped, tag = 'scratch operand']
  %s0 = inlined_call_operand.hbm [shape: f32[2,4,16,16], index: 0, kind: input, shape index: {}]
  %s1 = inlined_call_operand.hbm [shape: f32[2,4,16,16], index: 1, kind: input, shape index: {}]
  %s2 = inlined_call_operand.vmem [shape: f32[3,1,1], index: 2, kind: output, shape index: {}]
  %s3 = sld [smem:[#allocation0]]
  $region57: #{tpu_custom_call.1} parent=0
    _
  %s5 = ssub.s32 1, %s3
  %s6 = scalar_select 0, %s5, %s3
  $region1: #{tpu_custom_call.1} parent=0
    #allocation4 [shape = 'u8[16384]{0}', space=vmem, size = 0x4000, scoped, tag = 'input window, operand 0']
    #allocation5 [shape = 's32[2]{0}', space=sflag, size = 0x8, scoped, tag = 'scoped memory for tpu_custom_call.1']
    #allocation6 [shape = 'u8[16384]{0}', space=vmem, size = 0x4000, scoped, tag = 'input window, operand 1']
    #allocation7 [shape = 's32[2]{0}', space=sflag, size = 0x8, scoped, tag = 'scoped memory for tpu_custom_call.1']
    %7 = vsyncpa [#allocation5], 0
    %s8 = scalar_lea.sflag [#allocation5], 1
    %9 = vsyncpa %s8, 0
    %10 = vsyncpa [#allocation7], 0
    %s11 = scalar_lea.sflag [#allocation7], 1
    %12 = vsyncpa %s11, 0
    loop: start=0, step=1, limit=8
    $region2: #{tpu_custom_call.1} parent=1 // loop_pre_header
      _
    $region3: #{tpu_custom_call.1} parent=1 // loop_header
      %s14 = sphi 0, %s18
      %p15 = scmp.ge.s32.totalorder %s14, 8
      %s21 = sphi 0, %s40
      %s22 = sphi 0, %s36
      %s23 = sphi 0, %s32
      %s24 = sphi 0, %s21
      %s25 = sphi 0, %s22
      %s26 = sphi 0, %s23
      %s27 = sphi 0, %s24
      %s28 = sphi 0, %s25
      %s29 = sphi 0, %s26
      %s49 = sphi 0, %s51
      %s52 = sphi 0, %s49
      %s53 = sphi 0, %s52
      %s69 = sphi 0, %s53
      %s81 = sphi 0, %s83
      %s84 = sphi 0, %s81
      %s85 = sphi 0, %s84
      %s101 = sphi 0, %s85
      %s107 = sphi 0, %s109
      %s110 = sphi 0, %s107
      %s111 = sphi 0, %s110
      %s127 = sphi 0, %s111
    $region4: #{tpu_custom_call.1} parent=1 // loop_header_branch
      %17 = sbr.rel (%p15) target = $region8
    $region5: #{tpu_custom_call.1} parent=1 // loop_body
      %s19 = ssub.s32 %s14, 1
      %s20 = ssub.s32 %s14, 2
      %s30 = sadd.s32 1, %s23
      %p31 = scmp.ge.s32.totalorder %s30, 1
      %s32 = scalar_select %p31, 0, %s30
      %s33 = sadd.s32 1, %s22
      %s34 = scalar_select %p31, %s33, %s22
      %p35 = scmp.ge.s32.totalorder %s34, 2
      %s36 = scalar_select %p35, 0, %s34
      %s37 = sadd.s32 1, %s21
      %s38 = scalar_select %p35, %s37, %s21
      %p39 = scmp.ge.s32.totalorder %s38, 3
      %s40 = scalar_select %p39, 0, %s38
      %s41 = sadd.s32 %s21, 1
      %s42 = sadd.s32 %s40, 1
      %s43 = ssub.s32 %s22, %s36
      %s44 = ssub.s32 %s41, %s42
      %s45 = sor.u32 %s43, %s44
      %s46 = ssub.s32 %s23, %s32
      %s47 = sor.u32 %s45, %s46
      %p48 = scmp.eq.s32.totalorder %s47, 0
      %s50 = sadd.s32 %s49, 1
      %s51 = scalar_select %p48, %s49, %s50
      %p54 = pneg %p48
      %p55 = scmp.eq.s32.totalorder %s14, 5
      %p56 = por %p54, %p55
      %p57 = scmp.ne.s32.totalorder %s49, %s52
      %p58 = scmp.eq.s32.totalorder %s14, 0
      %p59 = por %p57, %p58
      %p60 = scmp.ne.s32.totalorder %s49, %s52
      %p61 = scmp.eq.s32.totalorder %s19, 5
      %p62 = por %p60, %p61
      %p63 = scmp.ne.s32.totalorder %s52, %s53
      %p64 = scmp.eq.s32.totalorder %s19, 0
      %p65 = por %p63, %p64
      %p66 = scmp.ne.s32.totalorder %s52, %s53
      %p67 = scmp.eq.s32.totalorder %s20, 5
      %p68 = por %p66, %p67
      %p70 = scmp.ne.s32.totalorder %s53, %s69
      %p71 = scmp.eq.s32.totalorder %s20, 0
      %p72 = por %p70, %p71
      %s73 = sadd.s32 %s21, 1
      %s74 = sadd.s32 %s40, 1
      %s75 = ssub.s32 %s22, %s36
      %s76 = ssub.s32 %s73, %s74
      %s77 = sor.u32 %s75, %s76
      %s78 = ssub.s32 %s23, %s32
      %s79 = sor.u32 %s77, %s78
      %p80 = scmp.eq.s32.totalorder %s79, 0
      %s82 = sadd.s32 %s81, 1
      %s83 = scalar_select %p80, %s81, %s82
      %p86 = pneg %p80
      %p87 = scmp.eq.s32.totalorder %s14, 5
      %p88 = por %p86, %p87
      %p89 = scmp.ne.s32.totalorder %s81, %s84
      %p90 = scmp.eq.s32.totalorder %s14, 0
      %p91 = por %p89, %p90
      %p92 = scmp.ne.s32.totalorder %s81, %s84
      %p93 = scmp.eq.s32.totalorder %s19, 5
      %p94 = por %p92, %p93
      %p95 = scmp.ne.s32.totalorder %s84, %s85
      %p96 = scmp.eq.s32.totalorder %s19, 0
      %p97 = por %p95, %p96
      %p98 = scmp.ne.s32.totalorder %s84, %s85
      %p99 = scmp.eq.s32.totalorder %s20, 5
      %p100 = por %p98, %p99
      %p102 = scmp.ne.s32.totalorder %s85, %s101
      %p103 = scmp.eq.s32.totalorder %s20, 0
      %p104 = por %p102, %p103
      %s105 = ssub.s32 %s21, %s40
      %p106 = scmp.eq.s32.totalorder %s105, 0
      %s108 = sadd.s32 %s107, 1
      %s109 = scalar_select %p106, %s107, %s108
      %p112 = pneg %p106
      %p113 = scmp.eq.s32.totalorder %s14, 5
      %p114 = por %p112, %p113
      %p115 = scmp.ne.s32.totalorder %s107, %s110
      %p116 = scmp.eq.s32.totalorder %s14, 0
      %p117 = por %p115, %p116
      %p118 = scmp.ne.s32.totalorder %s107, %s110
      %p119 = scmp.eq.s32.totalorder %s19, 5
      %p120 = por %p118, %p119
      %p121 = scmp.ne.s32.totalorder %s110, %s111
      %p122 = scmp.eq.s32.totalorder %s19, 0
      %p123 = por %p121, %p122
      %p124 = scmp.ne.s32.totalorder %s110, %s111
      %p125 = scmp.eq.s32.totalorder %s20, 5
      %p126 = por %p124, %p125
      %p128 = scmp.ne.s32.totalorder %s111, %s127
      %p129 = scmp.eq.s32.totalorder %s20, 0
      %p130 = por %p128, %p129
      %p131 = scmp.le.s32.totalorder 1, %s14
      %p132 = scmp.lt.s32.totalorder %s14, 7
      %p133 = pnand %p131, %p132
      %p134 = pneg %p133
      // Predicated region
      $region9: #{tpu_custom_call.1} parent=5 // pred_check
        _
      $region10: #{tpu_custom_call.1} parent=5 // pred_check_branch
        %136 = sbr.rel (%p133) target = $region12
      $region11: #{tpu_custom_call.1} parent=5 // pred_region
        %s137 = ssub.s32 %s14, 1
      $region12: #{tpu_custom_call.1} parent=5 // pred_fallthru
        _
      %p138 = scmp.lt.s32.totalorder %s14, 6
      // Predicated region
      $region13: #{tpu_custom_call.1} parent=5 // pred_check
        %p139 = pneg %p138
      $region14: #{tpu_custom_call.1} parent=5 // pred_check_branch
        %141 = sbr.rel (%p139) target = $region16
      $region15: #{tpu_custom_call.1} parent=5 // pred_region
        // Predicated region
        $region17: #{tpu_custom_call.1} parent=15 // pred_check
          %p142 = pneg %p59
        $region18: #{tpu_custom_call.1} parent=15 // pred_check_branch
          %144 = sbr.rel (%p142) target = $region20
        $region19: #{tpu_custom_call.1} parent=15 // pred_region
          %s145 = sand.u32 %s49, 1
          %s146 = scalar_lea.sflag [#allocation5], %s145
          %s147 = sand.u32 %s49, 1
          %s148 = smul.addr %s147, 16
          %s149 = scalar_lea.vmem [#allocation4], %s148
          %s150 = sadd.s32 %s21, 1
          %s151 = smul.u32 2, %s23
          %s153 = ssub.s32 256, 256
          %154 = vsyncadd %s146, %s153
          %s155 = smul.addr %s150, 2
          %s156 = sadd.s32 %s151, %s155
          %s157 = smul.addr %s22, 8
          %s158 = sadd.s32 %s156, %s157
          %s159 = smul.addr %s158, 128
          %s160 = scalar_lea.hbm %s0, %s159
          %s161 = sshll.u32 %s149, 4
          %s162 = int_to_ptr.vmem [resolvable:$true] %s161
          %167 = dma.hbm_to_vmem [thread:$0]  %s160, 256, %s162, %s146, 128, 128, 8
        $region20: #{tpu_custom_call.1} parent=15 // pred_fallthru
          _
        // Predicated region
        $region21: #{tpu_custom_call.1} parent=15 // pred_check
          %p168 = pneg %p91
        $region22: #{tpu_custom_call.1} parent=15 // pred_check_branch
          %170 = sbr.rel (%p168) target = $region24
        $region23: #{tpu_custom_call.1} parent=15 // pred_region
          %s171 = sand.u32 %s81, 1
          %s172 = scalar_lea.sflag [#allocation7], %s171
          %s173 = sand.u32 %s81, 1
          %s174 = smul.addr %s173, 16
          %s175 = scalar_lea.vmem [#allocation6], %s174
          %s176 = sadd.s32 %s21, 1
          %s177 = smul.u32 2, %s23
          %s179 = ssub.s32 256, 256
          %180 = vsyncadd %s172, %s179
          %s181 = smul.addr %s176, 2
          %s182 = sadd.s32 %s177, %s181
          %s183 = smul.addr %s22, 8
          %s184 = sadd.s32 %s182, %s183
          %s185 = smul.addr %s184, 128
          %s186 = scalar_lea.hbm %s1, %s185
          %s187 = sshll.u32 %s175, 4
          %s188 = int_to_ptr.vmem [resolvable:$true] %s187
          %193 = dma.hbm_to_vmem [thread:$0]  %s186, 256, %s188, %s172, 128, 128, 8
        $region24: #{tpu_custom_call.1} parent=15 // pred_fallthru
          _
      $region16: #{tpu_custom_call.1} parent=5 // pred_fallthru
        _
      %p194 = scmp.le.s32.totalorder 1, %s14
      %p195 = scmp.lt.s32.totalorder %s14, 7
      %p196 = pnand %p194, %p195
      %p197 = pneg %p196
      // Predicated region
      $region25: #{tpu_custom_call.1} parent=5 // pred_check
        _
      $region26: #{tpu_custom_call.1} parent=5 // pred_check_branch
        %199 = sbr.rel (%p196) target = $region28
      $region27: #{tpu_custom_call.1} parent=5 // pred_region
        %s200 = ssub.s32 %s14, 1
        %s201 = sand.u32 %s52, 1
        %s202 = scalar_lea.sflag [#allocation5], %s201
        %s203 = sand.u32 %s52, 1
        %s204 = smul.addr %s203, 16
        %s205 = scalar_lea.vmem [#allocation4], %s204
        // Predicated region
        $region29: #{tpu_custom_call.1} parent=27 // pred_check
          %p206 = pneg %p65
        $region30: #{tpu_custom_call.1} parent=27 // pred_check_branch
          %208 = sbr.rel (%p206) target = $region32
        $region31: #{tpu_custom_call.1} parent=27 // pred_region
          %209 = dma.done %s202, 256
        $region32: #{tpu_custom_call.1} parent=27 // pred_fallthru
          _
        %s210 = sand.u32 %s84, 1
        %s211 = scalar_lea.sflag [#allocation7], %s210
        %s212 = sand.u32 %s84, 1
        %s213 = smul.addr %s212, 16
        %s214 = scalar_lea.vmem [#allocation6], %s213
        // Predicated region
        $region33: #{tpu_custom_call.1} parent=27 // pred_check
          %p215 = pneg %p97
        $region34: #{tpu_custom_call.1} parent=27 // pred_check_branch
          %217 = sbr.rel (%p215) target = $region36
        $region35: #{tpu_custom_call.1} parent=27 // pred_region
          %218 = dma.done %s211, 256
        $region36: #{tpu_custom_call.1} parent=27 // pred_fallthru
          _
        %s219 = sand.u32 %s52, 1
        %s220 = scalar_lea.sflag [#allocation5], %s219
        %s221 = sand.u32 %s52, 1
        %s222 = smul.addr %s221, 16
        %s223 = scalar_lea.vmem [#allocation4], %s222
        %p224 = pneg %p65
        %p225 = pneg %p62
        %s226 = sand.u32 %s84, 1
        %s227 = scalar_lea.sflag [#allocation7], %s226
        %s228 = sand.u32 %s84, 1
        %s229 = smul.addr %s228, 16
        %s230 = scalar_lea.vmem [#allocation6], %s229
        %p231 = pneg %p97
        %p232 = pneg %p94
        %p233 = pneg %p123
        %p234 = pneg %p120
        %p235 = scmp.lt.s32.totalorder %s24, 2
        %s236 = scalar_select %p235, %s24, 2
        %s237 = scalar_lea.vmem %s2, %s236
        %s238 = sadd.s32 %s24, 1
        %s239 = smul.u32 2, %s26
        %s240 = sadd.s32 %s24, 1
        %s241 = smul.u32 2, %s26
        %p242 = scmp.lt.s32.totalorder %s24, 2
        %s243 = scalar_select %p242, %s24, 2
        %s244 = scalar_lea.vmem %s2, %s243
        %p245 = scmp.eq.s32.totalorder %s25, 0
        %p246 = scmp.eq.s32.totalorder %s26, 0
        %p247 = pnand %p245, %p246
        %p248 = pneg %p247
        %p249 = scmp.eq.s32.totalorder %s25, 1
        %p250 = pnand %p249, %p246
        %p251 = pneg %p250
        // Predicated region
        $region37: #{tpu_custom_call.1} parent=27 // pred_check
          _
        $region38: #{tpu_custom_call.1} parent=27 // pred_check_branch
          %253 = sbr.rel (%p247) target = $region40
        $region39: #{tpu_custom_call.1} parent=27 // pred_region
          %vm254 = vcmask 130048
          %255 = vst.msk [vmem:[#allocation2] sm:$0xff] %vm254, 0.0
          %256 = vst.msk [vmem:[#allocation2 + $0x8] sm:$0xff] %vm254, 0.0
          %257 = vst.msk [vmem:[#allocation3] sm:$0xff] %vm254, 0.0
          %258 = vst.msk [vmem:[#allocation3 + $0x8] sm:$0xff] %vm254, 0.0
        $region40: #{tpu_custom_call.1} parent=27 // pred_fallthru
          _
        %v259 = vld [vmem:[%s205] sm:$0xff]
        %v260 = vld [vmem:[%s205 + $0x8] sm:$0xff]
        %v261 = vld [vmem:[%s214] sm:$0xff]
        %v262 = vld [vmem:[%s214 + $0x8] sm:$0xff]
        %v263 = vld [vmem:[#allocation2] sm:$0xff]
        %v264 = vld [vmem:[#allocation2 + $0x8] sm:$0xff]
        %v265 = vmul.f32 %v259, %v261
        %v266 = vmul.f32 %v260, %v262
        %v267 = vadd.f32 %v263, %v265
        %v268 = vadd.f32 %v264, %v266
        %vm269 = vcmask 130048
        %270 = vst.msk [vmem:[#allocation2] sm:$0xff] %vm269, %v267
        %271 = vst.msk [vmem:[#allocation2 + $0x8] sm:$0xff] %vm269, %v268
        %v272 = vld [vmem:[#allocation3] sm:$0xff]
        %v273 = vld [vmem:[#allocation3 + $0x8] sm:$0xff]
        %v274 = vadd.f32 %v259, %v261
        %v275 = vadd.f32 %v260, %v262
        %v276 = vadd.f32 %v272, %v274
        %v277 = vadd.f32 %v273, %v275
        %278 = vst.msk [vmem:[#allocation3] sm:$0xff] %vm269, %v276
        %279 = vst.msk [vmem:[#allocation3 + $0x8] sm:$0xff] %vm269, %v277
        // Predicated region
        $region41: #{tpu_custom_call.1} parent=27 // pred_check
          _
        $region42: #{tpu_custom_call.1} parent=27 // pred_check_branch
          %281 = sbr.rel (%p250) target = $region44
        $region43: #{tpu_custom_call.1} parent=27 // pred_region
          %v282 = vld [vmem:[#allocation2] sm:$0xff]
          %v283 = vld [vmem:[#allocation2 + $0x8] sm:$0xff]
          %v284 = vsel %vm269, %v282, 0.0
          %v285 = vsel %vm269, %v283, 0.0
          %v286 = vadd.f32 %v284, %v285
          %287 = vadd.xlane.f32.xlu0 %v286
          %v288 = vpop.xlane.xlu0 %287
          %v289 = vrot.slane %v288, 4
          %v290 = vadd.f32 %v288, %v289
          %v291 = vrot.slane %v290, 2
          %v292 = vadd.f32 %v290, %v291
          %v293 = vrot.slane %v292, 1
          %v294 = vadd.f32 %v292, %v293
          %s295 = vtos %v294
          %v296 = vld [vmem:[#allocation3] sm:$0xff]
          %v297 = vld [vmem:[#allocation3 + $0x8] sm:$0xff]
          %v298 = vsel %vm269, %v296, 0.0
          %v299 = vsel %vm269, %v297, 0.0
          %v300 = vadd.f32 %v298, %v299
          %301 = vadd.xlane.f32.xlu0 %v300
          %v302 = vpop.xlane.xlu0 %301
          %v303 = vrot.slane %v302, 4
          %v304 = vadd.f32 %v302, %v303
          %v305 = vrot.slane %v304, 2
          %v306 = vadd.f32 %v304, %v305
          %v307 = vrot.slane %v306, 1
          %v308 = vadd.f32 %v306, %v307
          %s309 = vtos %v308
          %s310 = ssub.f32 %s309, %s295
          %s311 = sadd.f32 %s310, 1e-07
          %v312 = vstv %s311
          %v313 = vrcp.pop %v312
          %s314 = vtos %v313
          %s315 = smul.f32 %s295, %s314
          %v316 = vstv %s315
          %vm317 = vcmask 0
          %318 = vst.msk [vmem:[%s244] sm:$0x1] %vm317, %v316
        $region44: #{tpu_custom_call.1} parent=27 // pred_fallthru
          _
        %p319 = scmp.lt.s32.totalorder %s24, 2
        %s320 = scalar_select %p319, %s24, 2
        %s321 = scalar_lea.vmem %s2, %s320
        // Predicated region
        $region45: #{tpu_custom_call.1} parent=27 // pred_check
          %p322 = pneg %p120
        $region46: #{tpu_custom_call.1} parent=27 // pred_check_branch
          %324 = sbr.rel (%p322) target = $region48
        $region47: #{tpu_custom_call.1} parent=27 // pred_region
          _
        $region48: #{tpu_custom_call.1} parent=27 // pred_fallthru
          _
      $region28: #{tpu_custom_call.1} parent=5 // pred_fallthru
        _
      %p325 = scmp.le.s32.totalorder 2, %s14
      // Predicated region
      $region49: #{tpu_custom_call.1} parent=5 // pred_check
        %p326 = pneg %p325
      $region50: #{tpu_custom_call.1} parent=5 // pred_check_branch
        %328 = sbr.rel (%p326) target = $region52
      $region51: #{tpu_custom_call.1} parent=5 // pred_region
        %s329 = ssub.s32 %s14, 2
        // Predicated region
        $region53: #{tpu_custom_call.1} parent=51 // pred_check
          %p330 = pneg %p126
        $region54: #{tpu_custom_call.1} parent=51 // pred_check_branch
          %332 = sbr.rel (%p330) target = $region56
        $region55: #{tpu_custom_call.1} parent=51 // pred_region
          %p333 = scmp.lt.s32.totalorder %s27, 2
          %s334 = scalar_select %p333, %s27, 2
          %s335 = scalar_lea.vmem %s2, %s334
        $region56: #{tpu_custom_call.1} parent=51 // pred_fallthru
          _
      $region52: #{tpu_custom_call.1} parent=5 // pred_fallthru
        _
    $region6: #{tpu_custom_call.1} parent=1 // loop_footer
      %s18 = sadd.s32 1, %s14
    $region7: #{tpu_custom_call.1} parent=1 // loop_footer_branch
      %13 = sbr.rel target = $region3
    $region8: #{tpu_custom_call.1} parent=1 // loop_exit
      _
    %336 = vsyncpa [#allocation5], 1
    %s337 = scalar_lea.sflag [#allocation5], 1
    %338 = vsyncpa %s337, 1
    %339 = vsyncpa [#allocation7], 1
    %s340 = scalar_lea.sflag [#allocation7], 1
    %341 = vsyncpa %s340, 1

</llo_original>
